<compile_context>
chip_gen: v5e
topology: v5e:2x2
jax: 0.10.0
libtpu: 0.0.40
codegen_flags: <defaults>
</compile_context>

<pallas_src>
import jax
import jax.numpy as jnp
from jax.experimental import pallas as pl
from jax.experimental.pallas import tpu as pltpu

_LANES = 128          # lane width: labels are laid out (rows, 128)
_CHUNK_ROWS = 1024    # rows processed per in-kernel step (bounds temporaries)
_SUBLANE_PACK = 32    # int8 native sublane packing


def _cdiv(a, b):
    return -(-a // b)


def _round_up(x, m):
    return _cdiv(x, m) * m


def _gmean_partials_kernel(yt_ref, yp_ref, out_ref):
    """Accumulate per-lane partial sums of (y_true*y_pred, y_true, y_pred).

    out_ref is an (8, 128) f32 block resident across the inner ("arbitrary")
    grid axis; row 0 = tp, row 1 = sum(y_true), row 2 = sum(y_pred) per lane.
    Row reductions run on the MXU via a ones-vector contraction.
    """

    @pl.when(pl.program_id(1) == 0)
    def _init():
        out_ref[...] = jnp.zeros_like(out_ref)

    def accumulate(row0, nrows, ones_bf16):
        yt = yt_ref[pl.ds(row0, nrows), :].astype(jnp.bfloat16)   # {0,1}
        yp = yp_ref[pl.ds(row0, nrows), :].astype(jnp.bfloat16)
        tp = yt * yp                                              # exact in bf16
        # (1, nrows) @ (nrows, 128) -> (1, 128), f32 accumulation on the MXU.
        out_ref[0:1, :] += jnp.dot(ones_bf16, tp,
                                   preferred_element_type=jnp.float32)
        out_ref[1:2, :] += jnp.dot(ones_bf16, yt,
                                   preferred_element_type=jnp.float32)
        out_ref[2:3, :] += jnp.dot(ones_bf16, yp,
                                   preferred_element_type=jnp.float32)

    tile_rows = yt_ref.shape[0]
    n_full = tile_rows // _CHUNK_ROWS
    rem = tile_rows - n_full * _CHUNK_ROWS          # multiple of 32, < chunk

    if n_full:                                       # static
        ones_chunk = jnp.ones((1, _CHUNK_ROWS), dtype=jnp.bfloat16)

        @pl.loop(0, n_full)
        def _(j):
            accumulate(pl.multiple_of(j * _CHUNK_ROWS, _CHUNK_ROWS),
                       _CHUNK_ROWS, ones_chunk)

    if rem:                                          # static ragged tail
        accumulate(n_full * _CHUNK_ROWS, rem,
                   jnp.ones((1, rem), dtype=jnp.bfloat16))


def _geometric_mean_impl(y_true, y_pred, max_tile_rows=32768):
    """y_true, y_pred: 1-D {0,1} label arrays (int/bool/float) of length N."""
    assert y_true.ndim == 1 and y_true.shape == y_pred.shape
    n = y_true.shape[0]

    rows = max(1, _cdiv(n, _LANES))
    cap = _round_up(max(max_tile_rows, _SUBLANE_PACK), _SUBLANE_PACK)
    steps = _cdiv(rows, cap)
    # Split the streaming reduction across 2 TensorCores when there is more
    # than one tile (helps v7x; a size-2 "parallel" axis is harmless on 1-TC
    # chips -- it just runs sequentially).
    num_cores = 2 if steps >= 2 else 1
    steps = num_cores * _cdiv(steps, num_cores)
    steps_per_core = steps // num_cores
    tile_rows = _round_up(_cdiv(rows, steps), _SUBLANE_PACK)
    rows_padded = steps * tile_rows
    total = rows_padded * _LANES

    def prep(x):
        # int8 labels: 4x less HBM traffic than f32; no-op if already int8.
        x = x.astype(jnp.int8)
        # Zero pad (only up to 32-row granularity per tile): padded elements
        # contribute nothing to tp/s_t/s_p and tn is derived from the real n.
        x = jnp.pad(x, (0, total - n))
        return x.reshape(rows_padded, _LANES)

    yt = prep(y_true)
    yp = prep(y_pred)

    # 2 inputs x 2 pipeline buffers x tile bytes, plus headroom for in-kernel
    # chunk temporaries.  Explicit so v5e's 16 MiB default limit never bites.
    vmem_limit = int(max(32 * 1024 * 1024,
                         4 * tile_rows * _LANES + 8 * 1024 * 1024))

    partials = pl.pallas_call(
        _gmean_partials_kernel,
        out_shape=jax.ShapeDtypeStruct((num_cores * 8, _LANES), jnp.float32),
        grid_spec=pltpu.PrefetchScalarGridSpec(
            num_scalar_prefetch=0,
            grid=(num_cores, steps_per_core),
            in_specs=[
                pl.BlockSpec((tile_rows, _LANES),
                             lambda c, i: (c * steps_per_core + i, 0)),
                pl.BlockSpec((tile_rows, _LANES),
                             lambda c, i: (c * steps_per_core + i, 0)),
            ],
            out_specs=pl.BlockSpec((8, _LANES), lambda c, i: (c, 0)),
        ),
        compiler_params=pltpu.CompilerParams(
            dimension_semantics=("parallel", "arbitrary"),
            vmem_limit_bytes=vmem_limit,
        ),
    )(yt, yp)

    # Tiny scalar epilogue (combine the per-core per-lane partials) in JAX.
    parts = partials.reshape(num_cores, 8, _LANES)
    tp = jnp.sum(parts[:, 0, :])
    s_t = jnp.sum(parts[:, 1, :])
    s_p = jnp.sum(parts[:, 2, :])
    nf = jnp.float32(n)
    tn = nf - s_t - s_p + tp
    # specificity = tn / (n - s_t), sensitivity = tp / s_t
    return jnp.sqrt((tn * tp) / ((nf - s_t) * s_t))


geometric_mean = jax.jit(_geometric_mean_impl, static_argnames="max_tile_rows")


def _reference_gmean(y_true, y_pred):
    yt = y_true.astype(jnp.float32)
    yp = y_pred.astype(jnp.float32)
    tp = jnp.sum(yt * yp)
    tn = jnp.sum((1 - yt) * (1 - yp))
    fp = jnp.sum((1 - yt) * yp)
    fn = jnp.sum(yt * (1 - yp))
    return jnp.sqrt((tn / (tn + fp)) * (tp / (tp + fn)))


if __name__ == "__main__":
    key = jax.random.PRNGKey(0)
    k = jax.random.split(key, 6)

    # Case 1: tiny input -> single tile, single (remainder) chunk.
    n1 = 384
    yt1 = jax.random.bernoulli(k[0], 0.5, (n1,)).astype(jnp.int32)
    yp1 = jax.random.bernoulli(k[1], 0.5, (n1,)).astype(jnp.int32)
    g1 = geometric_mean(yt1, yp1)
    jax.block_until_ready(g1)
    r1 = _reference_gmean(yt1, yp1)
    assert jnp.allclose(g1, r1, rtol=1e-5, atol=1e-6), (g1, r1)

    # Case 2: small tile cap -> 2-way "parallel" core axis x multi-step grid.
    n2 = 12288
    yt2 = jax.random.bernoulli(k[2], 0.3, (n2,)).astype(jnp.int32)
    yp2 = jax.random.bernoulli(k[3], 0.5, (n2,)).astype(jnp.int32)
    g2 = geometric_mean(yt2, yp2, max_tile_rows=32)
    jax.block_until_ready(g2)
    r2 = _reference_gmean(yt2, yp2)
    assert jnp.allclose(g2, r2, rtol=1e-5, atol=1e-6), (g2, r2)

    # Case 3: default config -> single grid step, full 1024-row chunk loop
    # plus a ragged in-kernel tail.
    n3 = 150000
    yt3 = jax.random.bernoulli(k[4], 0.2, (n3,)).astype(jnp.int32)
    yp3 = jax.random.bernoulli(k[5], 0.6, (n3,)).astype(jnp.int32)
    g3 = geometric_mean(yt3, yp3)
    jax.block_until_ready(g3)
    r3 = _reference_gmean(yt3, yp3)
    assert jnp.allclose(g3, r3, rtol=1e-5, atol=1e-6), (g3, r3)

    print("KERNEL_OK")
</pallas_src>

<mosaic_0001>
module attributes {stable_mosaic.version = 11 : i64} {
  func.func @_gmean_partials_kernel(%arg0: i32, %arg1: i32, %arg2: memref<32x128xi8, #tpu.memory_space<vmem>>, %arg3: memref<32x128xi8, #tpu.memory_space<vmem>>, %arg4: memref<8x128xf32, #tpu.memory_space<vmem>>) attributes {dimension_semantics = [#tpu.dimension_semantics<parallel>, #tpu.dimension_semantics<arbitrary>], iteration_bounds = array<i64: 1, 1>, scalar_prefetch = 0 : i64, scratch_operands = 0 : i64, tpu.core_type = #tpu.core_type<tc>, window_params = [{transform_indices = @transform_0, window_bounds = array<i64: 32, 128>}, {transform_indices = @transform_1, window_bounds = array<i64: 32, 128>}, {transform_indices = @transform_2, window_bounds = array<i64: 8, 128>}]} {
    %c0_i32 = arith.constant 0 : i32
    %0 = arith.cmpi eq, %arg1, %c0_i32 : i32
    %1 = arith.extui %0 : i1 to i32
    %c0_i32_0 = arith.constant 0 : i32
    %2 = arith.cmpi ne, %1, %c0_i32_0 : i32
    scf.if %2 {
      %cst_17 = arith.constant 0.000000e+00 : f32
      %21 = vector.broadcast %cst_17 : f32 to vector<8x128xf32>
      %c0_18 = arith.constant 0 : index
      %c0_19 = arith.constant 0 : index
      %22 = vector.load %arg4[%c0_18, %c0_19] : memref<8x128xf32, #tpu.memory_space<vmem>>, vector<8x128xf32>
      tpu.vector_store %arg4[%c0_18, %c0_19], %21 {strides = array<i32>} : memref<8x128xf32, #tpu.memory_space<vmem>>, vector<8x128xf32>,
    } else {
    }
    %cst = arith.constant 1.000000e+00 : bf16
    %3 = vector.broadcast %cst : bf16 to vector<1x32xbf16>
    %c0 = arith.constant 0 : index
    %c0_1 = arith.constant 0 : index
    %4 = vector.load %arg2[%c0, %c0_1] : memref<32x128xi8, #tpu.memory_space<vmem>>, vector<32x128xi8>
    %5 = arith.sitofp %4 : vector<32x128xi8> to vector<32x128xbf16>
    %c0_2 = arith.constant 0 : index
    %c0_3 = arith.constant 0 : index
    %6 = vector.load %arg3[%c0_2, %c0_3] : memref<32x128xi8, #tpu.memory_space<vmem>>, vector<32x128xi8>
    %7 = arith.sitofp %6 : vector<32x128xi8> to vector<32x128xbf16>
    %8 = arith.mulf %5, %7 : vector<32x128xbf16>
    %c0_4 = arith.constant 0 : index
    %c0_5 = arith.constant 0 : index
    %9 = vector.load %arg4[%c0_4, %c0_5] : memref<8x128xf32, #tpu.memory_space<vmem>>, vector<1x128xf32>
    %cst_6 = arith.constant dense<0.000000e+00> : vector<1x128xf32>
    %10 = tpu.matmul %3, %8, %cst_6 {dimension_numbers = #tpu.dot_dimension_numbers<[1], [0], [0], [1], [0, 0, 1, 1], [], []>} : vector<1x32xbf16>, vector<32x128xbf16>, vector<1x128xf32> -> vector<1x128xf32>
    %11 = arith.addf %9, %10 : vector<1x128xf32>
    %c0_7 = arith.constant 0 : index
    %c0_8 = arith.constant 0 : index
    %12 = vector.load %arg4[%c0_7, %c0_8] : memref<8x128xf32, #tpu.memory_space<vmem>>, vector<1x128xf32>
    tpu.vector_store %arg4[%c0_7, %c0_8], %11 {strides = array<i32>} : memref<8x128xf32, #tpu.memory_space<vmem>>, vector<1x128xf32>,
    %c1 = arith.constant 1 : index
    %c0_9 = arith.constant 0 : index
    %13 = vector.load %arg4[%c1, %c0_9] : memref<8x128xf32, #tpu.memory_space<vmem>>, vector<1x128xf32>
    %cst_10 = arith.constant dense<0.000000e+00> : vector<1x128xf32>
    %14 = tpu.matmul %3, %5, %cst_10 {dimension_numbers = #tpu.dot_dimension_numbers<[1], [0], [0], [1], [0, 0, 1, 1], [], []>} : vector<1x32xbf16>, vector<32x128xbf16>, vector<1x128xf32> -> vector<1x128xf32>
    %15 = arith.addf %13, %14 : vector<1x128xf32>
    %c1_11 = arith.constant 1 : index
    %c0_12 = arith.constant 0 : index
    %16 = vector.load %arg4[%c1_11, %c0_12] : memref<8x128xf32, #tpu.memory_space<vmem>>, vector<1x128xf32>
    tpu.vector_store %arg4[%c1_11, %c0_12], %15 {strides = array<i32>} : memref<8x128xf32, #tpu.memory_space<vmem>>, vector<1x128xf32>,
    %c2 = arith.constant 2 : index
    %c0_13 = arith.constant 0 : index
    %17 = vector.load %arg4[%c2, %c0_13] : memref<8x128xf32, #tpu.memory_space<vmem>>, vector<1x128xf32>
    %cst_14 = arith.constant dense<0.000000e+00> : vector<1x128xf32>
    %18 = tpu.matmul %3, %7, %cst_14 {dimension_numbers = #tpu.dot_dimension_numbers<[1], [0], [0], [1], [0, 0, 1, 1], [], []>} : vector<1x32xbf16>, vector<32x128xbf16>, vector<1x128xf32> -> vector<1x128xf32>
    %19 = arith.addf %17, %18 : vector<1x128xf32>
    %c2_15 = arith.constant 2 : index
    %c0_16 = arith.constant 0 : index
    %20 = vector.load %arg4[%c2_15, %c0_16] : memref<8x128xf32, #tpu.memory_space<vmem>>, vector<1x128xf32>
    tpu.vector_store %arg4[%c2_15, %c0_16], %19 {strides = array<i32>} : memref<8x128xf32, #tpu.memory_space<vmem>>, vector<1x128xf32>,
    return
  }
  func.func @transform_0(%arg0: i32, %arg1: i32) -> (i32, i32) {
    %c1_i32 = arith.constant 1 : i32
    %0 = arith.muli %arg0, %c1_i32 : i32
    %1 = arith.addi %0, %arg1 : i32
    %c0_i32 = arith.constant 0 : i32
    %c0_i32_0 = arith.constant 0 : i32
    return %1, %c0_i32 : i32, i32
  }
  func.func @transform_1(%arg0: i32, %arg1: i32) -> (i32, i32) {
    %c1_i32 = arith.constant 1 : i32
    %0 = arith.muli %arg0, %c1_i32 : i32
    %1 = arith.addi %0, %arg1 : i32
    %c0_i32 = arith.constant 0 : i32
    %c0_i32_0 = arith.constant 0 : i32
    return %1, %c0_i32 : i32, i32
  }
  func.func @transform_2(%arg0: i32, %arg1: i32) -> (i32, i32) {
    %c0_i32 = arith.constant 0 : i32
    %c0_i32_0 = arith.constant 0 : i32
    return %arg0, %c0_i32 : i32, i32
  }
}

</mosaic_0001>

<llo_original>
// kernel: _geometric_mean_impl.1
$region0: #{_geometric_mean_impl.1}
  #allocation0 [shape = 'u32[]', space=smem, size = 0x4, offset = 0x4, fixed_abs, tag = 'smem constant byte address 0x4 - core index']
  #allocation1 [shape = 'u32[72,128]{1,0:T(1,128)}', space=vmem, size = 0x9000, scoped, tag = 'internal scratch']
  %s0 = inlined_call_operand.vmem [shape: s8[32,128], index: 0, kind: input, shape index: {}]
  %s1 = inlined_call_operand.vmem [shape: s8[32,128], index: 1, kind: input, shape index: {}]
  %s2 = inlined_call_operand.vmem [shape: f32[8,128], index: 2, kind: output, shape index: {}]
  %s3 = sld [smem:[#allocation0]]
  $region22: #{_geometric_mean_impl.1} parent=0
    _
  %s5 = ssub.s32 1, %s3
  %s6 = scalar_select 0, %s5, %s3
  // Predicated region
  $region2: #{_geometric_mean_impl.1} parent=0 // pred_check
    _
  $region3: #{_geometric_mean_impl.1} parent=0 // pred_check_branch
    %8 = sbr.rel (0) target = $region5
  $region4: #{_geometric_mean_impl.1} parent=0 // pred_region
    %s9 = sadd.s32 0, 0
    %p10 = scmp.lt.s32.totalorder %s9, 0
    %s11 = scalar_select %p10, %s9, 0
    %s12 = smul.addr %s11, 8
    %s13 = scalar_lea.vmem %s0, %s12
    %s14 = sadd.s32 0, 0
  $region5: #{_geometric_mean_impl.1} parent=0 // pred_fallthru
    _
  // Predicated region
  $region6: #{_geometric_mean_impl.1} parent=0 // pred_check
    _
  $region7: #{_geometric_mean_impl.1} parent=0 // pred_check_branch
    %16 = sbr.rel (0) target = $region9
  $region8: #{_geometric_mean_impl.1} parent=0 // pred_region
    %s17 = sadd.s32 0, 0
    %p18 = scmp.lt.s32.totalorder %s17, 0
    %s19 = scalar_select %p18, %s17, 0
    %s20 = smul.addr %s19, 8
    %s21 = scalar_lea.vmem %s1, %s20
    %s22 = sadd.s32 0, 0
  $region9: #{_geometric_mean_impl.1} parent=0 // pred_fallthru
    _
  %s23 = sadd.s32 0, 0
  %p24 = scmp.lt.s32.totalorder %s23, 0
  %s25 = scalar_select %p24, %s23, 0
  %s26 = smul.addr %s25, 8
  %s27 = scalar_lea.vmem %s0, %s26
  %s28 = sadd.s32 0, 0
  %p29 = scmp.lt.s32.totalorder %s28, 0
  %s30 = scalar_select %p29, %s28, 0
  %s31 = smul.addr %s30, 8
  %s32 = scalar_lea.vmem %s1, %s31
  %s33 = sadd.s32 0, 0
  %p34 = scmp.lt.s32.totalorder %s33, 0
  %s35 = scalar_select %p34, %s33, 0
  %s36 = smul.addr %s35, 8
  %s37 = scalar_lea.vmem %s0, %s36
  %s38 = sadd.s32 0, 0
  %s39 = sadd.s32 0, 0
  %p40 = scmp.lt.s32.totalorder %s39, 0
  %s41 = scalar_select %p40, %s39, 0
  %s42 = smul.addr %s41, 8
  %s43 = scalar_lea.vmem %s1, %s42
  %s44 = sadd.s32 0, 0
  %p47 = scmp.eq.s32.totalorder 0, 0
  // Predicated region
  $region10: #{_geometric_mean_impl.1} parent=0 // pred_check
    %p48 = pneg %p47
  $region11: #{_geometric_mean_impl.1} parent=0 // pred_check_branch
    %50 = sbr.rel (%p48) target = $region13
  $region12: #{_geometric_mean_impl.1} parent=0 // pred_region
    %51 = vst [vmem:[%s2] sm:$0xff] 0.0
  $region13: #{_geometric_mean_impl.1} parent=0 // pred_fallthru
    _
  %v52 = vld [vmem:[%s37] sm:$0xff]
  %v53 = vunpack.c.0.s8 %v52
  %v54 = vunpack.c.1.s8 %v52
  %v55 = vunpack.c.2.s8 %v52
  %v56 = vunpack.c.3.s8 %v52
  %v57 = vcvt.s32.f32 %v53
  %v58 = vcvt.s32.f32 %v54
  %v59 = vcvt.s32.f32 %v55
  %v60 = vcvt.s32.f32 %v56
  %v61 = vpack.c.bf16 %v57, %v57
  %v62 = vpack.c.bf16 %v58, %v58
  %v63 = vpack.c.bf16 %v59, %v59
  %v64 = vpack.c.bf16 %v60, %v60
  %v65 = vld [vmem:[%s43] sm:$0xff]
  %v66 = vunpack.c.0.s8 %v65
  %v67 = vunpack.c.1.s8 %v65
  %v68 = vunpack.c.2.s8 %v65
  %v69 = vunpack.c.3.s8 %v65
  %v70 = vcvt.s32.f32 %v66
  %v71 = vcvt.s32.f32 %v67
  %v72 = vcvt.s32.f32 %v68
  %v73 = vcvt.s32.f32 %v69
  %v74 = vpack.c.bf16 %v70, %v70
  %v75 = vpack.c.bf16 %v71, %v71
  %v76 = vpack.c.bf16 %v72, %v72
  %v77 = vpack.c.bf16 %v73, %v73
  %v78 = vunpack.c.l.bf16 %v61
  %v79 = vunpack.c.l.bf16 %v62
  %v80 = vunpack.c.l.bf16 %v63
  %v81 = vunpack.c.l.bf16 %v64
  %v82 = vunpack.c.l.bf16 %v74
  %v83 = vunpack.c.l.bf16 %v75
  %v84 = vunpack.c.l.bf16 %v76
  %v85 = vunpack.c.l.bf16 %v77
  %v86 = vmul.f32 %v78, %v82
  %v87 = vmul.f32 %v79, %v83
  %v88 = vmul.f32 %v80, %v84
  %v89 = vmul.f32 %v81, %v85
  %v90 = vpack.c.bf16 %v87, %v86
  %v91 = vpack.c.bf16 %v89, %v88
  %v92 = vld [vmem:[%s2] sm:$0x1]
  %vm93 = vcmask 261120
  %v95 = vsel %vm93, 1065369472, 0
  %97 = vmatpush.bf16.msra.mxu0 0
  %98 = vmatpush.bf16.msra.mxu0 0
  %99 = vmatpush.bf16.msra.mxu0 0
  %100 = vmatpush.bf16.msra.mxu0 0
  %101 = vmatpush.bf16.msra.mxu0 0
  %102 = vmatpush.bf16.msra.mxu0 0
  %103 = vmatpush.bf16.msra.mxu0 %v91
  %104 = vmatpush.bf16.msra.mxu0 %v90
  %105 = vmatmul.bf16.gmra.mxu0 %v95
  %v106 = vpop.f32.mrf.mxu0
  %v107 = vadd.f32 0.0, %v106
  %v108 = vpop.f32.mrf.mxu0
  %109 = vdwg.mxu0
  %v110 = vadd.f32 %v92, %v107
  %111 = vst [vmem:[%s2] sm:$0x1] %v110
  %v112 = vld [vmem:[%s2 + $0x1] sm:$0x1]
  %v117 = vunpack.c.l.b16 %v61
  %v118 = vunpack.c.l.b16 %v62
  %v119 = vunpack.c.l.b16 %v63
  %v120 = vunpack.c.l.b16 %v64
  %v121 = vpack.c.b16 %v118, %v117
  %v122 = vpack.c.b16 %v120, %v119
  %125 = vmatpush.bf16.msra.mxu0 0
  %126 = vmatpush.bf16.msra.mxu0 0
  %127 = vmatpush.bf16.msra.mxu0 0
  %128 = vmatpush.bf16.msra.mxu0 0
  %129 = vmatpush.bf16.msra.mxu0 0
  %130 = vmatpush.bf16.msra.mxu0 0
  %131 = vmatpush.bf16.msra.mxu0 %v122
  %132 = vmatpush.bf16.msra.mxu0 %v121
  %133 = vmatmul.bf16.gmra.mxu0 %v95
  %v134 = vpop.f32.mrf.mxu0
  %v135 = vadd.f32 0.0, %v134
  %v136 = vpop.f32.mrf.mxu0
  %137 = vdwg.mxu0
  %v138 = vadd.f32 %v112, %v135
  %139 = vst [vmem:[%s2 + $0x1] sm:$0x1] %v138
  %v140 = vld [vmem:[%s2 + $0x2] sm:$0x1]
  %v145 = vunpack.c.l.b16 %v74
  %v146 = vunpack.c.l.b16 %v75
  %v147 = vunpack.c.l.b16 %v76
  %v148 = vunpack.c.l.b16 %v77
  %v149 = vpack.c.b16 %v146, %v145
  %v150 = vpack.c.b16 %v148, %v147
  %153 = vmatpush.bf16.msra.mxu0 0
  %154 = vmatpush.bf16.msra.mxu0 0
  %155 = vmatpush.bf16.msra.mxu0 0
  %156 = vmatpush.bf16.msra.mxu0 0
  %157 = vmatpush.bf16.msra.mxu0 0
  %158 = vmatpush.bf16.msra.mxu0 0
  %159 = vmatpush.bf16.msra.mxu0 %v150
  %160 = vmatpush.bf16.msra.mxu0 %v149
  %161 = vmatmul.bf16.gmra.mxu0 %v95
  %v162 = vpop.f32.mrf.mxu0
  %v163 = vadd.f32 0.0, %v162
  %v164 = vpop.f32.mrf.mxu0
  %165 = vdwg.mxu0
  %v166 = vadd.f32 %v140, %v163
  %167 = vst [vmem:[%s2 + $0x2] sm:$0x1] %v166
  // Predicated region
  $region14: #{_geometric_mean_impl.1} parent=0 // pred_check
    _
  $region15: #{_geometric_mean_impl.1} parent=0 // pred_check_branch
    %169 = sbr.rel (0) target = $region17
  $region16: #{_geometric_mean_impl.1} parent=0 // pred_region
    _
  $region17: #{_geometric_mean_impl.1} parent=0 // pred_fallthru
    _
  // Predicated region
  $region18: #{_geometric_mean_impl.1} parent=0 // pred_check
    _
  $region19: #{_geometric_mean_impl.1} parent=0 // pred_check_branch
    %171 = sbr.rel (0) target = $region21
  $region20: #{_geometric_mean_impl.1} parent=0 // pred_region
    _
  $region21: #{_geometric_mean_impl.1} parent=0 // pred_fallthru
    _

</llo_original>
